<compile_context>
chip_gen: v6e
topology: v6e:2x2x1
jax: 0.10.0
libtpu: 0.0.40
codegen_flags: <defaults>
</compile_context>

<pallas_src>
import jax
import jax.numpy as jnp
from jax.experimental import pallas as pl
from jax.experimental.pallas import tpu as pltpu

_SUBLANE = 8
_NEG_BIG = -1e30  # pad-column bias; safe because logits stay f32 in-kernel


def _round_up(n, m):
    return ((n + m - 1) // m) * m


# ----------------------------------------------------------------------------
# Main (batch-tiled, softmax over the action axis) kernel.
# ----------------------------------------------------------------------------
def _ppo_tiled_kernel(x_ref, w1_ref, b1_ref, w2_ref, b2_ref, wp_ref, bp_ref,
                      out_ref):
    # x_ref: (TB, S) f32; weights bf16 in (in, out) layout; biases f32 (1, out).
    x = x_ref[...].astype(w1_ref.dtype)  # bf16 cast in-kernel (no wrapper pass)

    # layer[0]: Linear(state_size, layer_1) + ReLU      (MXU bf16, f32 accum)
    h1 = jnp.dot(x, w1_ref[...], preferred_element_type=jnp.float32) + b1_ref[...]
    h1 = jnp.maximum(h1, 0.0).astype(w2_ref.dtype)

    # layer[2]: Linear(layer_1, layer_1), then F.relu on the Sequential output
    h2 = jnp.dot(h1, w2_ref[...], preferred_element_type=jnp.float32) + b2_ref[...]
    h = jnp.maximum(h2, 0.0).astype(wp_ref.dtype)

    # policy head, padded only to 8 output columns.  Padded columns have
    # weight 0 and bias -1e30, so exp(pad - max) underflows to exactly 0 and
    # the softmax over the padded axis equals the softmax over the real actions.
    logits = jnp.dot(h, wp_ref[...], preferred_element_type=jnp.float32) + bp_ref[...]

    m = jnp.max(logits, axis=1, keepdims=True)
    e = jnp.exp(logits - m)
    # Exact normalization (denominator work is tiny; keeps sum(p) == 1 to f32
    # precision for downstream Categorical sampling / log-prob ratios).
    out_ref[...] = e / jnp.sum(e, axis=1, keepdims=True)


# ----------------------------------------------------------------------------
# Fallback kernel: whole batch resident, softmax across the batch axis
# (softmax_dim == 0 on 2-D input).  bf16 MXU, f32 elementwise.
# ----------------------------------------------------------------------------
def _ppo_whole_kernel(x_ref, w1_ref, b1_ref, w2_ref, b2_ref, wp_ref, bp_ref,
                      out_ref):
    x = x_ref[...].astype(w1_ref.dtype)
    h1 = jnp.maximum(
        jnp.dot(x, w1_ref[...], preferred_element_type=jnp.float32) + b1_ref[...],
        0.0).astype(w2_ref.dtype)
    h2 = jnp.dot(h1, w2_ref[...], preferred_element_type=jnp.float32) + b2_ref[...]
    h = jnp.maximum(h2, 0.0).astype(wp_ref.dtype)
    logits = jnp.dot(h, wp_ref[...], preferred_element_type=jnp.float32) + bp_ref[...]
    m = jnp.max(logits, axis=0, keepdims=True)
    e = jnp.exp(logits - m)
    out_ref[...] = e / jnp.sum(e, axis=0, keepdims=True)


# ----------------------------------------------------------------------------
# One-time parameter preparation (cache the result across forward calls).
# ----------------------------------------------------------------------------
def prepare_params(params):
    """Transpose to (in, out), cast MXU operands to bf16, pad policy head to 8
    output columns (weight 0 / bias -1e30), reshape biases to (1, out)."""
    w1, b1, w2, b2, wp, bp = params
    action_size, layer_1 = wp.shape
    state_size = w1.shape[1]
    a_pad = max(_round_up(action_size, _SUBLANE), _SUBLANE)
    bf = jnp.bfloat16

    w1_t = w1.T.astype(bf)
    w2_t = w2.T.astype(bf)
    wp_t = jnp.zeros((layer_1, a_pad), bf).at[:, :action_size].set(wp.T.astype(bf))
    b1_r = b1[None, :].astype(jnp.float32)
    b2_r = b2[None, :].astype(jnp.float32)
    bp_r = jnp.full((1, a_pad), _NEG_BIG, jnp.float32).at[:, :action_size].set(
        bp[None, :].astype(jnp.float32))

    return {
        "w1_t": w1_t, "b1_r": b1_r,
        "w2_t": w2_t, "b2_r": b2_r,
        "wp_t": wp_t, "bp_r": bp_r,
        "state_size": state_size, "layer_1": layer_1,
        "action_size": action_size, "a_pad": a_pad,
    }


def _ppo_forward_whole(x, prep):
    """softmax_dim=0 path: whole batch must be resident (softmax across batch)."""
    B = x.shape[0]
    a_pad = prep["a_pad"]
    w1_t, b1_r = prep["w1_t"], prep["b1_r"]
    w2_t, b2_r = prep["w2_t"], prep["b2_r"]
    wp_t, bp_r = prep["wp_t"], prep["bp_r"]

    full = lambda shape: pl.BlockSpec(shape, lambda: (0,) * len(shape))
    out = pl.pallas_call(
        _ppo_whole_kernel,
        out_shape=jax.ShapeDtypeStruct((B, a_pad), jnp.float32),
        grid=(),
        in_specs=[full(x.shape),
                  full(w1_t.shape), full(b1_r.shape),
                  full(w2_t.shape), full(b2_r.shape),
                  full(wp_t.shape), full(bp_r.shape)],
        out_specs=full((B, a_pad)),
        # Bounded so the fully-resident path stays inside v7x's 64 MiB VMEM.
        compiler_params=pltpu.CompilerParams(vmem_limit_bytes=48 * 1024 * 1024),
        # TODO(synk): for very large B this should become a two-pass streamed
        # softmax over batch tiles instead of a whole-batch-resident kernel.
    )(x, w1_t, b1_r, w2_t, b2_r, wp_t, bp_r)
    return out[:, :prep["action_size"]]


# ----------------------------------------------------------------------------
# Public wrapper.
# ----------------------------------------------------------------------------
def ppo_forward(x, params, softmax_dim=1, block_b=2048):
    """PPO.forward: x [B, state_size] (or [state_size]) -> action probabilities.

    `params` may be the raw (w1, b1, w2, b2, wp, bp) tuple or the cached result
    of prepare_params(params) — pass the latter in hot loops.
    """
    prep = params if isinstance(params, dict) else prepare_params(params)
    S = prep["state_size"]
    L1 = prep["layer_1"]
    action_size = prep["action_size"]
    a_pad = prep["a_pad"]

    squeeze = False
    if x.ndim == 1:
        # get_action path: 1-D state, softmax over the action axis of the 1-D
        # output == batched softmax_dim=1 on [1, state_size].
        x = x[None, :]
        softmax_dim = 1
        squeeze = True

    if x.dtype != jnp.float32:
        x = x.astype(jnp.float32)

    if softmax_dim == 0:
        # Softmax across the batch needs the whole batch resident: no B tiling.
        out = _ppo_forward_whole(x, prep)
        return out[0] if squeeze else out

    B = x.shape[0]

    # Batch tile: as large as possible (amortize per-grid-step overhead), but
    # keep each x buffer comfortably inside the scoped-VMEM default.
    tb = min(_round_up(B, _SUBLANE), max(_round_up(block_b, _SUBLANE), _SUBLANE))
    tb_cap = max(_SUBLANE, ((8 * 1024 * 1024) // (S * 4)) // _SUBLANE * _SUBLANE)
    tb = min(tb, tb_cap)
    b_pad = _round_up(B, tb)

    # Pad only the ragged tail (no full padded copy when B % tb == 0).
    xb = x if b_pad == B else jnp.pad(x, ((0, b_pad - B), (0, 0)))

    w1_t, b1_r = prep["w1_t"], prep["b1_r"]
    w2_t, b2_r = prep["w2_t"], prep["b2_r"]
    wp_t, bp_r = prep["wp_t"], prep["bp_r"]

    grid = (b_pad // tb,)
    resident = lambda shape: pl.BlockSpec(shape, lambda i: (0,) * len(shape))

    cost = pl.CostEstimate(
        flops=2 * b_pad * (S * L1 + L1 * L1 + L1 * a_pad),
        transcendentals=b_pad * a_pad,
        bytes_accessed=int(b_pad * S * 4 + b_pad * a_pad * 4
                           + (w1_t.size + w2_t.size + wp_t.size) * 2
                           + (b1_r.size + b2_r.size + bp_r.size) * 4),
    )

    out = pl.pallas_call(
        _ppo_tiled_kernel,
        out_shape=jax.ShapeDtypeStruct((b_pad, a_pad), jnp.float32),
        grid=grid,
        in_specs=[
            pl.BlockSpec((tb, S), lambda i: (i, 0)),     # x: batch-tiled, f32
            resident(w1_t.shape), resident(b1_r.shape),  # weights VMEM-resident
            resident(w2_t.shape), resident(b2_r.shape),
            resident(wp_t.shape), resident(bp_r.shape),
        ],
        out_specs=pl.BlockSpec((tb, a_pad), lambda i: (i, 0)),
        compiler_params=pltpu.CompilerParams(
            dimension_semantics=("parallel",)),          # megacore sharding
        cost_estimate=cost,
    )(xb, w1_t, b1_r, w2_t, b2_r, wp_t, bp_r)

    out = out[:B, :action_size]
    if squeeze:
        out = out[0]
    return out


# ----------------------------------------------------------------------------
# Params & references.
# ----------------------------------------------------------------------------
def init_params(key, state_size, layer_1, action_size):
    """Deterministic synthetic params, PyTorch Linear layout (out, in)."""
    ks = jax.random.split(key, 6)

    def lin(kw, kb, out_f, in_f):
        bound = 1.0 / jnp.sqrt(in_f)
        w = jax.random.uniform(kw, (out_f, in_f), jnp.float32, -bound, bound)
        b = jax.random.uniform(kb, (out_f,), jnp.float32, -bound, bound)
        return w, b

    w1, b1 = lin(ks[0], ks[1], layer_1, state_size)
    w2, b2 = lin(ks[2], ks[3], layer_1, layer_1)
    wp, bp = lin(ks[4], ks[5], action_size, layer_1)
    return (w1, b1, w2, b2, wp, bp)


def _reference_f32(x, params, axis=1):
    w1, b1, w2, b2, wp, bp = params
    h = jnp.maximum(jnp.maximum(x @ w1.T + b1, 0.0) @ w2.T + b2, 0.0)
    z = h @ wp.T + bp
    e = jnp.exp(z - jnp.max(z, axis=axis, keepdims=True))
    return e / jnp.sum(e, axis=axis, keepdims=True)


def _reference_bf16(x, params, axis=1):
    """Same bf16-matmul / f32-elementwise recipe as the kernels."""
    w1, b1, w2, b2, wp, bp = params
    bf = jnp.bfloat16
    h1 = jnp.maximum(
        jnp.dot(x.astype(bf), w1.T.astype(bf),
                preferred_element_type=jnp.float32) + b1, 0.0)
    h2 = jnp.dot(h1.astype(bf), w2.T.astype(bf),
                 preferred_element_type=jnp.float32) + b2
    h = jnp.maximum(h2, 0.0)
    z = jnp.dot(h.astype(bf), wp.T.astype(bf),
                preferred_element_type=jnp.float32) + bp
    e = jnp.exp(z - jnp.max(z, axis=axis, keepdims=True))
    return e / jnp.sum(e, axis=axis, keepdims=True)


if __name__ == "__main__":
    # small shapes implied by the module: state vector -> hidden -> actions
    B, STATE, LAYER1, ACTIONS = 16, 16, 32, 4

    key = jax.random.PRNGKey(0)
    kx, kp = jax.random.split(key)
    x = jax.random.normal(kx, (B, STATE), jnp.float32)
    params = init_params(kp, STATE, LAYER1, ACTIONS)

    # One-time weight-layout prep, reused across all forward calls below.
    prep = prepare_params(params)

    # Batched call as in ppo_update (softmax over the action axis); small batch
    # tile so the grid has >1 step and the pipelined path is exercised.
    prob = ppo_forward(x, prep, softmax_dim=1, block_b=8)
    prob = jax.block_until_ready(prob)

    ref_bf16 = _reference_bf16(x, params, axis=1)
    ref_f32 = _reference_f32(x, params, axis=1)

    assert prob.shape == (B, ACTIONS)
    assert jnp.allclose(prob, ref_bf16, atol=5e-3, rtol=5e-3), "mismatch (bf16 ref)"
    assert jnp.allclose(prob, ref_f32, atol=3e-2, rtol=3e-2), "mismatch (f32 ref)"
    assert jnp.allclose(jnp.sum(prob, axis=1), jnp.ones((B,)), atol=1e-5)

    # 1-D get_action path (softmax over the actions of a single state).
    p1 = jax.block_until_ready(ppo_forward(x[0], prep))
    assert p1.shape == (ACTIONS,)
    assert jnp.allclose(p1, prob[0], atol=5e-3, rtol=5e-3)

    # softmax_dim=0 fallback path (softmax across the batch), non-multiple-of-8 B.
    x0 = x[:12]
    prob0 = jax.block_until_ready(ppo_forward(x0, prep, softmax_dim=0))
    ref0 = _reference_bf16(x0, params, axis=0)
    assert prob0.shape == (12, ACTIONS)
    assert jnp.allclose(prob0, ref0, atol=5e-3, rtol=5e-3), "mismatch (dim0 ref)"
    assert jnp.allclose(jnp.sum(prob0, axis=0), jnp.ones((ACTIONS,)), atol=1e-5)

    # TODO(synk): Categorical sampling, value head, GAE and the Adam update are
    # host/XLA-side logic outside forward() and are not expressed as kernels.
    print("KERNEL_OK")
</pallas_src>

<mosaic_0001>
module attributes {stable_mosaic.version = 11 : i64} {
  func.func @_ppo_tiled_kernel(%arg0: i32, %arg1: memref<8x16xf32, #tpu.memory_space<vmem>>, %arg2: memref<16x32xbf16, #tpu.memory_space<vmem>>, %arg3: memref<1x32xf32, #tpu.memory_space<vmem>>, %arg4: memref<32x32xbf16, #tpu.memory_space<vmem>>, %arg5: memref<1x32xf32, #tpu.memory_space<vmem>>, %arg6: memref<32x8xbf16, #tpu.memory_space<vmem>>, %arg7: memref<1x8xf32, #tpu.memory_space<vmem>>, %arg8: memref<8x8xf32, #tpu.memory_space<vmem>>) attributes {dimension_semantics = [#tpu.dimension_semantics<parallel>], iteration_bounds = array<i64: 2>, scalar_prefetch = 0 : i64, scratch_operands = 0 : i64, tpu.core_type = #tpu.core_type<tc>, window_params = [{transform_indices = @transform_0, window_bounds = array<i64: 8, 16>}, {pipeline_mode = #tpu.pipeline_mode<synchronous>, transform_indices = @transform_1, window_bounds = array<i64: 16, 32>}, {pipeline_mode = #tpu.pipeline_mode<synchronous>, transform_indices = @transform_2, window_bounds = array<i64: 1, 32>}, {pipeline_mode = #tpu.pipeline_mode<synchronous>, transform_indices = @transform_3, window_bounds = array<i64: 32, 32>}, {pipeline_mode = #tpu.pipeline_mode<synchronous>, transform_indices = @transform_4, window_bounds = array<i64: 1, 32>}, {pipeline_mode = #tpu.pipeline_mode<synchronous>, transform_indices = @transform_5, window_bounds = array<i64: 32, 8>}, {pipeline_mode = #tpu.pipeline_mode<synchronous>, transform_indices = @transform_6, window_bounds = array<i64: 1, 8>}, {transform_indices = @transform_7, window_bounds = array<i64: 8, 8>}]} {
    %c0 = arith.constant 0 : index
    %c0_0 = arith.constant 0 : index
    %0 = vector.load %arg1[%c0, %c0_0] : memref<8x16xf32, #tpu.memory_space<vmem>>, vector<8x16xf32>
    %1 = arith.truncf %0 : vector<8x16xf32> to vector<8x16xbf16>
    %c0_1 = arith.constant 0 : index
    %c0_2 = arith.constant 0 : index
    %2 = vector.load %arg2[%c0_1, %c0_2] : memref<16x32xbf16, #tpu.memory_space<vmem>>, vector<16x32xbf16>
    %cst = arith.constant dense<0.000000e+00> : vector<8x32xf32>
    %3 = tpu.matmul %1, %2, %cst {dimension_numbers = #tpu.dot_dimension_numbers<[1], [0], [0], [1], [0, 0, 1, 1], [], []>} : vector<8x16xbf16>, vector<16x32xbf16>, vector<8x32xf32> -> vector<8x32xf32>
    %c0_3 = arith.constant 0 : index
    %c0_4 = arith.constant 0 : index
    %4 = vector.load %arg3[%c0_3, %c0_4] : memref<1x32xf32, #tpu.memory_space<vmem>>, vector<1x32xf32>
    %5 = vector.broadcast %4 : vector<1x32xf32> to vector<8x32xf32>
    %6 = arith.addf %3, %5 : vector<8x32xf32>
    %cst_5 = arith.constant 0.000000e+00 : f32
    %7 = vector.broadcast %cst_5 : f32 to vector<8x32xf32>
    %8 = arith.maximumf %6, %7 : vector<8x32xf32>
    %9 = arith.truncf %8 : vector<8x32xf32> to vector<8x32xbf16>
    %c0_6 = arith.constant 0 : index
    %c0_7 = arith.constant 0 : index
    %10 = vector.load %arg4[%c0_6, %c0_7] : memref<32x32xbf16, #tpu.memory_space<vmem>>, vector<32x32xbf16>
    %cst_8 = arith.constant dense<0.000000e+00> : vector<8x32xf32>
    %11 = tpu.matmul %9, %10, %cst_8 {dimension_numbers = #tpu.dot_dimension_numbers<[1], [0], [0], [1], [0, 0, 1, 1], [], []>} : vector<8x32xbf16>, vector<32x32xbf16>, vector<8x32xf32> -> vector<8x32xf32>
    %c0_9 = arith.constant 0 : index
    %c0_10 = arith.constant 0 : index
    %12 = vector.load %arg5[%c0_9, %c0_10] : memref<1x32xf32, #tpu.memory_space<vmem>>, vector<1x32xf32>
    %13 = vector.broadcast %12 : vector<1x32xf32> to vector<8x32xf32>
    %14 = arith.addf %11, %13 : vector<8x32xf32>
    %cst_11 = arith.constant 0.000000e+00 : f32
    %15 = vector.broadcast %cst_11 : f32 to vector<8x32xf32>
    %16 = arith.maximumf %14, %15 : vector<8x32xf32>
    %17 = arith.truncf %16 : vector<8x32xf32> to vector<8x32xbf16>
    %c0_12 = arith.constant 0 : index
    %c0_13 = arith.constant 0 : index
    %18 = vector.load %arg6[%c0_12, %c0_13] : memref<32x8xbf16, #tpu.memory_space<vmem>>, vector<32x8xbf16>
    %cst_14 = arith.constant dense<0.000000e+00> : vector<8x8xf32>
    %19 = tpu.matmul %17, %18, %cst_14 {dimension_numbers = #tpu.dot_dimension_numbers<[1], [0], [0], [1], [0, 0, 1, 1], [], []>} : vector<8x32xbf16>, vector<32x8xbf16>, vector<8x8xf32> -> vector<8x8xf32>
    %c0_15 = arith.constant 0 : index
    %c0_16 = arith.constant 0 : index
    %20 = vector.load %arg7[%c0_15, %c0_16] : memref<1x8xf32, #tpu.memory_space<vmem>>, vector<1x8xf32>
    %21 = vector.broadcast %20 : vector<1x8xf32> to vector<8x8xf32>
    %22 = arith.addf %19, %21 : vector<8x8xf32>
    %cst_17 = arith.constant dense<0xFF800000> : vector<8xf32>
    %23 = vector.multi_reduction <maximumf>, %22, %cst_17 [1] : vector<8x8xf32> to vector<8xf32>
    %24 = vector.shape_cast %23 : vector<8xf32> to vector<8x1xf32>
    %25 = vector.broadcast %24 : vector<8x1xf32> to vector<8x8xf32>
    %26 = arith.subf %22, %25 : vector<8x8xf32>
    %27 = math.exp %26 : vector<8x8xf32>
    %cst_18 = arith.constant dense<0.000000e+00> : vector<8xf32>
    %28 = vector.multi_reduction <add>, %27, %cst_18 [1] : vector<8x8xf32> to vector<8xf32>
    %29 = vector.shape_cast %28 : vector<8xf32> to vector<8x1xf32>
    %30 = vector.broadcast %29 : vector<8x1xf32> to vector<8x8xf32>
    %31 = arith.divf %27, %30 : vector<8x8xf32>
    %c0_19 = arith.constant 0 : index
    %c0_20 = arith.constant 0 : index
    %32 = vector.load %arg8[%c0_19, %c0_20] : memref<8x8xf32, #tpu.memory_space<vmem>>, vector<8x8xf32>
    tpu.vector_store %arg8[%c0_19, %c0_20], %31 {strides = array<i32>} : memref<8x8xf32, #tpu.memory_space<vmem>>, vector<8x8xf32>,
    return
  }
  func.func @transform_0(%arg0: i32) -> (i32, i32) {
    %c0_i32 = arith.constant 0 : i32
    %c0_i32_0 = arith.constant 0 : i32
    return %arg0, %c0_i32 : i32, i32
  }
  func.func @transform_1(%arg0: i32) -> (i32, i32) {
    %c0_i32 = arith.constant 0 : i32
    %c0_i32_0 = arith.constant 0 : i32
    %c0_i32_1 = arith.constant 0 : i32
    return %c0_i32, %c0_i32_0 : i32, i32
  }
  func.func @transform_2(%arg0: i32) -> (i32, i32) {
    %c0_i32 = arith.constant 0 : i32
    %c0_i32_0 = arith.constant 0 : i32
    %c0_i32_1 = arith.constant 0 : i32
    return %c0_i32, %c0_i32_0 : i32, i32
  }
  func.func @transform_3(%arg0: i32) -> (i32, i32) {
    %c0_i32 = arith.constant 0 : i32
    %c0_i32_0 = arith.constant 0 : i32
    %c0_i32_1 = arith.constant 0 : i32
    return %c0_i32, %c0_i32_0 : i32, i32
  }
  func.func @transform_4(%arg0: i32) -> (i32, i32) {
    %c0_i32 = arith.constant 0 : i32
    %c0_i32_0 = arith.constant 0 : i32
    %c0_i32_1 = arith.constant 0 : i32
    return %c0_i32, %c0_i32_0 : i32, i32
  }
  func.func @transform_5(%arg0: i32) -> (i32, i32) {
    %c0_i32 = arith.constant 0 : i32
    %c0_i32_0 = arith.constant 0 : i32
    %c0_i32_1 = arith.constant 0 : i32
    return %c0_i32, %c0_i32_0 : i32, i32
  }
  func.func @transform_6(%arg0: i32) -> (i32, i32) {
    %c0_i32 = arith.constant 0 : i32
    %c0_i32_0 = arith.constant 0 : i32
    %c0_i32_1 = arith.constant 0 : i32
    return %c0_i32, %c0_i32_0 : i32, i32
  }
  func.func @transform_7(%arg0: i32) -> (i32, i32) {
    %c0_i32 = arith.constant 0 : i32
    %c0_i32_0 = arith.constant 0 : i32
    return %arg0, %c0_i32 : i32, i32
  }
}

</mosaic_0001>

<llo_original>
// kernel: tpu_custom_call.1
$region0: #{tpu_custom_call.1}
  #allocation0 [shape = 'u32[]', space=smem, size = 0x4, offset = 0x4, fixed_abs, tag = 'smem constant byte address 0x4 - core index']
  #allocation1 [shape = 'u32[144,128]{1,0:T(1,128)}', space=vmem, size = 0x12000, scoped, tag = 'internal scratch']
  %s0 = inlined_call_operand.vmem [shape: f32[16,16], index: 0, kind: input, shape index: {}]
  %s1 = inlined_call_operand.hbm [shape: bf16[16,32], index: 1, kind: input, shape index: {}]
  %s2 = inlined_call_operand.vmem [shape: f32[1,32], index: 2, kind: input, shape index: {}]
  %s3 = inlined_call_operand.hbm [shape: bf16[32,32], index: 3, kind: input, shape index: {}]
  %s4 = inlined_call_operand.vmem [shape: f32[1,32], index: 4, kind: input, shape index: {}]
  %s5 = inlined_call_operand.vmem [shape: bf16[32,8], index: 5, kind: input, shape index: {}]
  %s6 = inlined_call_operand.vmem [shape: f32[1,8], index: 6, kind: input, shape index: {}]
  %s7 = inlined_call_operand.vmem [shape: f32[16,8], index: 7, kind: output, shape index: {}]
  %s8 = sld [smem:[#allocation0]]
  $region69: #{tpu_custom_call.1} parent=0
    _
  %s10 = ssub.s32 1, %s8
  %s11 = scalar_select 0, %s10, %s8
  $region1: #{tpu_custom_call.1} parent=0
    #allocation2 [shape = 'u8[4096]{0}', space=vmem, size = 0x1000, scoped, tag = 'input window, operand 1, single buffered']
    #allocation3 [shape = 's32[2]{0}', space=sflag, size = 0x8, scoped, tag = 'scoped memory for tpu_custom_call.1']
    #allocation4 [shape = 'u8[8192]{0}', space=vmem, size = 0x2000, scoped, tag = 'input window, operand 3, single buffered']
    #allocation5 [shape = 's32[1]{0}', space=sflag, size = 0x4, scoped, tag = 'scoped memory for tpu_custom_call.1']
    %12 = vsyncpa [#allocation3], 0
    %13 = vsyncpa [#allocation5], 0
    loop: start=0, step=1, limit=4
    $region2: #{tpu_custom_call.1} parent=1 // loop_pre_header
      _
    $region3: #{tpu_custom_call.1} parent=1 // loop_header
      %s15 = sphi 0, %s19
      %p16 = scmp.ge.s32.totalorder %s15, 4
      %s25 = sphi 0, %s27
      %s28 = sphi 0, %s25
      %s29 = sphi 0, %s28
      %s45 = sphi 0, %s29
      %s49 = sphi 0, %s49
      %s51 = sphi 0, %s49
      %s52 = sphi 0, %s51
      %s66 = sphi 0, %s52
      %s70 = sphi 0, %s70
      %s72 = sphi 0, %s70
      %s73 = sphi 0, %s72
      %s87 = sphi 0, %s73
      %s91 = sphi 0, %s91
      %s93 = sphi 0, %s91
      %s94 = sphi 0, %s93
      %s108 = sphi 0, %s94
      %s112 = sphi 0, %s112
      %s114 = sphi 0, %s112
      %s115 = sphi 0, %s114
      %s129 = sphi 0, %s115
      %s133 = sphi 0, %s133
      %s135 = sphi 0, %s133
      %s136 = sphi 0, %s135
      %s150 = sphi 0, %s136
      %s154 = sphi 0, %s154
      %s156 = sphi 0, %s154
      %s157 = sphi 0, %s156
      %s171 = sphi 0, %s157
      %s177 = sphi 0, %s179
      %s180 = sphi 0, %s177
      %s181 = sphi 0, %s180
      %s197 = sphi 0, %s181
    $region4: #{tpu_custom_call.1} parent=1 // loop_header_branch
      %18 = sbr.rel (%p16) target = $region8
    $region5: #{tpu_custom_call.1} parent=1 // loop_body
      %s20 = ssub.s32 %s15, 1
      %s21 = ssub.s32 %s15, 2
      %s22 = sadd.s32 %s15, 1
      %s23 = ssub.s32 %s15, %s22
      %p24 = scmp.eq.s32.totalorder %s23, 0
      %s26 = sadd.s32 %s25, 1
      %s27 = scalar_select %p24, %s25, %s26
      %p30 = pneg %p24
      %p31 = scmp.eq.s32.totalorder %s15, 1
      %p32 = por %p30, %p31
      %p33 = scmp.ne.s32.totalorder %s25, %s28
      %p34 = scmp.eq.s32.totalorder %s15, 0
      %p35 = por %p33, %p34
      %p36 = scmp.ne.s32.totalorder %s25, %s28
      %p37 = scmp.eq.s32.totalorder %s20, 1
      %p38 = por %p36, %p37
      %p39 = scmp.ne.s32.totalorder %s28, %s29
      %p40 = scmp.eq.s32.totalorder %s20, 0
      %p41 = por %p39, %p40
      %p42 = scmp.ne.s32.totalorder %s28, %s29
      %p43 = scmp.eq.s32.totalorder %s21, 1
      %p44 = por %p42, %p43
      %p46 = scmp.ne.s32.totalorder %s29, %s45
      %p47 = scmp.eq.s32.totalorder %s21, 0
      %p48 = por %p46, %p47
      %s50 = sadd.s32 %s49, 1
      %p53 = scmp.eq.s32.totalorder %s15, 1
      %p54 = scmp.ne.s32.totalorder %s49, %s51
      %p55 = scmp.eq.s32.totalorder %s15, 0
      %p56 = por %p54, %p55
      %p57 = scmp.ne.s32.totalorder %s49, %s51
      %p58 = scmp.eq.s32.totalorder %s20, 1
      %p59 = por %p57, %p58
      %p60 = scmp.ne.s32.totalorder %s51, %s52
      %p61 = scmp.eq.s32.totalorder %s20, 0
      %p62 = por %p60, %p61
      %p63 = scmp.ne.s32.totalorder %s51, %s52
      %p64 = scmp.eq.s32.totalorder %s21, 1
      %p65 = por %p63, %p64
      %p67 = scmp.ne.s32.totalorder %s52, %s66
      %p68 = scmp.eq.s32.totalorder %s21, 0
      %p69 = por %p67, %p68
      %s71 = sadd.s32 %s70, 1
      %p74 = scmp.eq.s32.totalorder %s15, 1
      %p75 = scmp.ne.s32.totalorder %s70, %s72
      %p76 = scmp.eq.s32.totalorder %s15, 0
      %p77 = por %p75, %p76
      %p78 = scmp.ne.s32.totalorder %s70, %s72
      %p79 = scmp.eq.s32.totalorder %s20, 1
      %p80 = por %p78, %p79
      %p81 = scmp.ne.s32.totalorder %s72, %s73
      %p82 = scmp.eq.s32.totalorder %s20, 0
      %p83 = por %p81, %p82
      %p84 = scmp.ne.s32.totalorder %s72, %s73
      %p85 = scmp.eq.s32.totalorder %s21, 1
      %p86 = por %p84, %p85
      %p88 = scmp.ne.s32.totalorder %s73, %s87
      %p89 = scmp.eq.s32.totalorder %s21, 0
      %p90 = por %p88, %p89
      %s92 = sadd.s32 %s91, 1
      %p95 = scmp.eq.s32.totalorder %s15, 1
      %p96 = scmp.ne.s32.totalorder %s91, %s93
      %p97 = scmp.eq.s32.totalorder %s15, 0
      %p98 = por %p96, %p97
      %p99 = scmp.ne.s32.totalorder %s91, %s93
      %p100 = scmp.eq.s32.totalorder %s20, 1
      %p101 = por %p99, %p100
      %p102 = scmp.ne.s32.totalorder %s93, %s94
      %p103 = scmp.eq.s32.totalorder %s20, 0
      %p104 = por %p102, %p103
      %p105 = scmp.ne.s32.totalorder %s93, %s94
      %p106 = scmp.eq.s32.totalorder %s21, 1
      %p107 = por %p105, %p106
      %p109 = scmp.ne.s32.totalorder %s94, %s108
      %p110 = scmp.eq.s32.totalorder %s21, 0
      %p111 = por %p109, %p110
      %s113 = sadd.s32 %s112, 1
      %p116 = scmp.eq.s32.totalorder %s15, 1
      %p117 = scmp.ne.s32.totalorder %s112, %s114
      %p118 = scmp.eq.s32.totalorder %s15, 0
      %p119 = por %p117, %p118
      %p120 = scmp.ne.s32.totalorder %s112, %s114
      %p121 = scmp.eq.s32.totalorder %s20, 1
      %p122 = por %p120, %p121
      %p123 = scmp.ne.s32.totalorder %s114, %s115
      %p124 = scmp.eq.s32.totalorder %s20, 0
      %p125 = por %p123, %p124
      %p126 = scmp.ne.s32.totalorder %s114, %s115
      %p127 = scmp.eq.s32.totalorder %s21, 1
      %p128 = por %p126, %p127
      %p130 = scmp.ne.s32.totalorder %s115, %s129
      %p131 = scmp.eq.s32.totalorder %s21, 0
      %p132 = por %p130, %p131
      %s134 = sadd.s32 %s133, 1
      %p137 = scmp.eq.s32.totalorder %s15, 1
      %p138 = scmp.ne.s32.totalorder %s133, %s135
      %p139 = scmp.eq.s32.totalorder %s15, 0
      %p140 = por %p138, %p139
      %p141 = scmp.ne.s32.totalorder %s133, %s135
      %p142 = scmp.eq.s32.totalorder %s20, 1
      %p143 = por %p141, %p142
      %p144 = scmp.ne.s32.totalorder %s135, %s136
      %p145 = scmp.eq.s32.totalorder %s20, 0
      %p146 = por %p144, %p145
      %p147 = scmp.ne.s32.totalorder %s135, %s136
      %p148 = scmp.eq.s32.totalorder %s21, 1
      %p149 = por %p147, %p148
      %p151 = scmp.ne.s32.totalorder %s136, %s150
      %p152 = scmp.eq.s32.totalorder %s21, 0
      %p153 = por %p151, %p152
      %s155 = sadd.s32 %s154, 1
      %p158 = scmp.eq.s32.totalorder %s15, 1
      %p159 = scmp.ne.s32.totalorder %s154, %s156
      %p160 = scmp.eq.s32.totalorder %s15, 0
      %p161 = por %p159, %p160
      %p162 = scmp.ne.s32.totalorder %s154, %s156
      %p163 = scmp.eq.s32.totalorder %s20, 1
      %p164 = por %p162, %p163
      %p165 = scmp.ne.s32.totalorder %s156, %s157
      %p166 = scmp.eq.s32.totalorder %s20, 0
      %p167 = por %p165, %p166
      %p168 = scmp.ne.s32.totalorder %s156, %s157
      %p169 = scmp.eq.s32.totalorder %s21, 1
      %p170 = por %p168, %p169
      %p172 = scmp.ne.s32.totalorder %s157, %s171
      %p173 = scmp.eq.s32.totalorder %s21, 0
      %p174 = por %p172, %p173
      %s175 = ssub.s32 %s15, %s22
      %p176 = scmp.eq.s32.totalorder %s175, 0
      %s178 = sadd.s32 %s177, 1
      %s179 = scalar_select %p176, %s177, %s178
      %p182 = pneg %p176
      %p183 = scmp.eq.s32.totalorder %s15, 1
      %p184 = por %p182, %p183
      %p185 = scmp.ne.s32.totalorder %s177, %s180
      %p186 = scmp.eq.s32.totalorder %s15, 0
      %p187 = por %p185, %p186
      %p188 = scmp.ne.s32.totalorder %s177, %s180
      %p189 = scmp.eq.s32.totalorder %s20, 1
      %p190 = por %p188, %p189
      %p191 = scmp.ne.s32.totalorder %s180, %s181
      %p192 = scmp.eq.s32.totalorder %s20, 0
      %p193 = por %p191, %p192
      %p194 = scmp.ne.s32.totalorder %s180, %s181
      %p195 = scmp.eq.s32.totalorder %s21, 1
      %p196 = por %p194, %p195
      %p198 = scmp.ne.s32.totalorder %s181, %s197
      %p199 = scmp.eq.s32.totalorder %s21, 0
      %p200 = por %p198, %p199
      %p201 = scmp.le.s32.totalorder 1, %s15
      %p202 = scmp.lt.s32.totalorder %s15, 3
      %p203 = pnand %p201, %p202
      %p204 = pneg %p203
      // Predicated region
      $region9: #{tpu_custom_call.1} parent=5 // pred_check
        _
      $region10: #{tpu_custom_call.1} parent=5 // pred_check_branch
        %206 = sbr.rel (%p203) target = $region12
      $region11: #{tpu_custom_call.1} parent=5 // pred_region
        %s207 = ssub.s32 %s15, 1
        // Predicated region
        $region13: #{tpu_custom_call.1} parent=11 // pred_check
          %p208 = pneg %p62
        $region14: #{tpu_custom_call.1} parent=11 // pred_check_branch
          %210 = sbr.rel (%p208) target = $region16
        $region15: #{tpu_custom_call.1} parent=11 // pred_region
          %s212 = ssub.s32 128, 128
          %213 = vsyncadd [#allocation3], %s212
          %s214 = sshll.u32 [#allocation2], 4
          %s215 = int_to_ptr.vmem [resolvable:$true] %s214
          %220 = dma.hbm_to_vmem [thread:$0]  %s1, 128, %s215, [#allocation3], 64, 64, 4
        $region16: #{tpu_custom_call.1} parent=11 // pred_fallthru
          _
        // Predicated region
        $region17: #{tpu_custom_call.1} parent=11 // pred_check
          %p221 = pneg %p83
        $region18: #{tpu_custom_call.1} parent=11 // pred_check_branch
          %223 = sbr.rel (%p221) target = $region20
        $region19: #{tpu_custom_call.1} parent=11 // pred_region
          _
        $region20: #{tpu_custom_call.1} parent=11 // pred_fallthru
          _
        // Predicated region
        $region21: #{tpu_custom_call.1} parent=11 // pred_check
          %p224 = pneg %p104
        $region22: #{tpu_custom_call.1} parent=11 // pred_check_branch
          %226 = sbr.rel (%p224) target = $region24
        $region23: #{tpu_custom_call.1} parent=11 // pred_region
          %s228 = ssub.s32 256, 256
          %229 = vsyncadd [#allocation5], %s228
          %s230 = sshll.u32 [#allocation4], 4
          %s231 = int_to_ptr.vmem [resolvable:$true] %s230
          %236 = dma.hbm_to_vmem [thread:$0]  %s3, 256, %s231, [#allocation5], 64, 64, 4
        $region24: #{tpu_custom_call.1} parent=11 // pred_fallthru
          _
        // Predicated region
        $region25: #{tpu_custom_call.1} parent=11 // pred_check
          %p237 = pneg %p125
        $region26: #{tpu_custom_call.1} parent=11 // pred_check_branch
          %239 = sbr.rel (%p237) target = $region28
        $region27: #{tpu_custom_call.1} parent=11 // pred_region
          _
        $region28: #{tpu_custom_call.1} parent=11 // pred_fallthru
          _
        // Predicated region
        $region29: #{tpu_custom_call.1} parent=11 // pred_check
          %p240 = pneg %p146
        $region30: #{tpu_custom_call.1} parent=11 // pred_check_branch
          %242 = sbr.rel (%p240) target = $region32
        $region31: #{tpu_custom_call.1} parent=11 // pred_region
          _
        $region32: #{tpu_custom_call.1} parent=11 // pred_fallthru
          _
        // Predicated region
        $region33: #{tpu_custom_call.1} parent=11 // pred_check
          %p243 = pneg %p167
        $region34: #{tpu_custom_call.1} parent=11 // pred_check_branch
          %245 = sbr.rel (%p243) target = $region36
        $region35: #{tpu_custom_call.1} parent=11 // pred_region
          _
        $region36: #{tpu_custom_call.1} parent=11 // pred_fallthru
          _
      $region12: #{tpu_custom_call.1} parent=5 // pred_fallthru
        _
      %p246 = scmp.lt.s32.totalorder %s15, 2
      // Predicated region
      $region37: #{tpu_custom_call.1} parent=5 // pred_check
        %p247 = pneg %p246
      $region38: #{tpu_custom_call.1} parent=5 // pred_check_branch
        %249 = sbr.rel (%p247) target = $region40
      $region39: #{tpu_custom_call.1} parent=5 // pred_region
        // Predicated region
        $region41: #{tpu_custom_call.1} parent=39 // pred_check
          %p250 = pneg %p35
        $region42: #{tpu_custom_call.1} parent=39 // pred_check_branch
          %252 = sbr.rel (%p250) target = $region44
        $region43: #{tpu_custom_call.1} parent=39 // pred_region
          %p253 = scmp.lt.s32.totalorder %s15, 1
          %s254 = scalar_select %p253, %s15, 1
          %s255 = smul.addr %s254, 8
          %s256 = scalar_lea.vmem %s0, %s255
        $region44: #{tpu_custom_call.1} parent=39 // pred_fallthru
          _
      $region40: #{tpu_custom_call.1} parent=5 // pred_fallthru
        _
      %p257 = scmp.le.s32.totalorder 1, %s15
      %p258 = scmp.lt.s32.totalorder %s15, 3
      %p259 = pnand %p257, %p258
      %p260 = pneg %p259
      // Predicated region
      $region45: #{tpu_custom_call.1} parent=5 // pred_check
        _
      $region46: #{tpu_custom_call.1} parent=5 // pred_check_branch
        %262 = sbr.rel (%p259) target = $region48
      $region47: #{tpu_custom_call.1} parent=5 // pred_region
        %s263 = ssub.s32 %s15, 1
        // Predicated region
        $region49: #{tpu_custom_call.1} parent=47 // pred_check
          %p264 = pneg %p62
        $region50: #{tpu_custom_call.1} parent=47 // pred_check_branch
          %266 = sbr.rel (%p264) target = $region52
        $region51: #{tpu_custom_call.1} parent=47 // pred_region
          %267 = dma.done [#allocation3], 128
        $region52: #{tpu_custom_call.1} parent=47 // pred_fallthru
          _
        // Predicated region
        $region53: #{tpu_custom_call.1} parent=47 // pred_check
          %p268 = pneg %p104
        $region54: #{tpu_custom_call.1} parent=47 // pred_check_branch
          %270 = sbr.rel (%p268) target = $region56
        $region55: #{tpu_custom_call.1} parent=47 // pred_region
          %271 = dma.done [#allocation5], 256
        $region56: #{tpu_custom_call.1} parent=47 // pred_fallthru
          _
        %p272 = scmp.lt.s32.totalorder %s20, 1
        %s273 = scalar_select %p272, %s20, 1
        %s274 = smul.addr %s273, 8
        %s275 = scalar_lea.vmem %s0, %s274
        %p276 = pneg %p41
        %p277 = pneg %p38
        %p278 = pneg %p62
        %p279 = pneg %p59
        %p280 = pneg %p83
        %p281 = pneg %p80
        %p282 = pneg %p104
        %p283 = pneg %p101
        %p284 = pneg %p125
        %p285 = pneg %p122
        %p286 = pneg %p146
        %p287 = pneg %p143
        %p288 = pneg %p167
        %p289 = pneg %p164
        %p290 = pneg %p193
        %p291 = pneg %p190
        %p292 = scmp.lt.s32.totalorder %s20, 1
        %s293 = scalar_select %p292, %s20, 1
        %s294 = smul.addr %s293, 8
        %s295 = scalar_lea.vmem %s7, %s294
        %p296 = scmp.lt.s32.totalorder %s20, 1
        %s297 = scalar_select %p296, %s20, 1
        %s298 = smul.addr %s297, 8
        %s299 = scalar_lea.vmem %s0, %s298
        %p300 = scmp.lt.s32.totalorder %s20, 1
        %s301 = scalar_select %p300, %s20, 1
        %s302 = smul.addr %s301, 8
        %s303 = scalar_lea.vmem %s7, %s302
        %v305 = vld [vmem:[%s299] sm:$0xff]
        %v306 = vpack.c.bf16 %v305, %v305
        %v307 = vld [vmem:[#allocation2] sm:$0xf]
        %v308 = vld [vmem:[#allocation2 + $0x4] sm:$0xf]
        %v309 = vld [vmem:[%s2] sm:$0x1]
        %v311 = vlaneseq
        %v312 = vshrl.u32 %v311, 7
        %v313 = vsub.s32 0, %v312
        %v314 = vrot.slane %v309, %v313
        %v318 = vunpack.c.l.b16 %v307
        %v319 = vunpack.c.l.b16 %v308
        %v320 = vpack.c.b16 %v319, %v318
        %vm322 = vcmask 130048
        %v324 = vsel %vm322, %v306, 0
        %326 = vmatprep.subr.bf16.mxu0 0
        %327 = vmatpush1.bf16.msra.mxu0 0
        %328 = vmatprep.subr.bf16.mxu0 0
        %329 = vmatpush1.bf16.msra.mxu0 0
        %330 = vmatprep.subr.bf16.mxu0 0
        %331 = vmatpush1.bf16.msra.mxu0 0
        %332 = vmatprep.subr.bf16.mxu0 0
        %333 = vmatpush1.bf16.msra.mxu0 0
        %334 = vmatprep.subr.bf16.mxu0 0
        %335 = vmatpush1.bf16.msra.mxu0 0
        %336 = vmatprep.subr.bf16.mxu0 0
        %337 = vmatpush1.bf16.msra.mxu0 0
        %338 = vmatprep.subr.bf16.mxu0 0
        %339 = vmatpush1.bf16.msra.mxu0 0
        %340 = vmatprep.subr.bf16.mxu0 0
        %341 = vmatpush1.bf16.msra.mxu0 %v320
        %342 = vmatprep.subr.bf16.mxu0 0
        %343 = vmatpush2.bf16.msra.mxu0 0
        %344 = vmatprep.subr.bf16.mxu0 0
        %345 = vmatpush2.bf16.msra.mxu0 0
        %346 = vmatprep.subr.bf16.mxu0 0
        %347 = vmatpush2.bf16.msra.mxu0 0
        %348 = vmatprep.subr.bf16.mxu0 0
        %349 = vmatpush2.bf16.msra.mxu0 0
        %350 = vmatprep.subr.bf16.mxu0 0
        %351 = vmatpush2.bf16.msra.mxu0 0
        %352 = vmatprep.subr.bf16.mxu0 0
        %353 = vmatpush2.bf16.msra.mxu0 0
        %354 = vmatprep.subr.bf16.mxu0 0
        %355 = vmatpush2.bf16.msra.mxu0 0
        %356 = vmatprep.subr.bf16.mxu0 0
        %357 = vmatpush2.bf16.msra.mxu0 0
        %358 = vmatprep.mubr.bf16.mxu0 0
        %359 = vmatmul.mubr.bf16.gmra.mxu0 %v324
        %v360 = vpop.f32.mrf.mxu0
        %v361 = vadd.f32 %v314, %v360
        %v362 = vpop.f32.mrf.mxu0
        %v363 = vpop.f32.mrf.mxu0
        %v364 = vpop.f32.mrf.mxu0
        %365 = vdwg.mxu0
        %v366 = vmax.f32 %v361, 0.0
        %v367 = vpack.c.bf16 %v366, %v366
        %v368 = vld [vmem:[#allocation4] sm:$0xf]
        %v369 = vld [vmem:[#allocation4 + $0x4] sm:$0xf]
        %v370 = vld [vmem:[#allocation4 + $0x8] sm:$0xf]
        %v371 = vld [vmem:[#allocation4 + $0xc] sm:$0xf]
        %v372 = vld [vmem:[%s4] sm:$0x1]
        %v374 = vlaneseq
        %v375 = vshrl.u32 %v374, 7
        %v376 = vsub.s32 0, %v375
        %v377 = vrot.slane %v372, %v376
        %v383 = vunpack.c.l.b16 %v368
        %v384 = vunpack.c.l.b16 %v369
        %v385 = vunpack.c.l.b16 %v370
        %v386 = vunpack.c.l.b16 %v371
        %v387 = vpack.c.b16 %v384, %v383
        %v388 = vpack.c.b16 %v386, %v385
        %vm391 = vcmask 261120
        %v393 = vsel %vm391, %v367, 0
        %395 = vmatprep.subr.bf16.mxu0 0
        %396 = vmatpush1.bf16.msra.mxu0 0
        %397 = vmatprep.subr.bf16.mxu0 0
        %398 = vmatpush1.bf16.msra.mxu0 0
        %399 = vmatprep.subr.bf16.mxu0 0
        %400 = vmatpush1.bf16.msra.mxu0 0
        %401 = vmatprep.subr.bf16.mxu0 0
        %402 = vmatpush1.bf16.msra.mxu0 0
        %403 = vmatprep.subr.bf16.mxu0 0
        %404 = vmatpush1.bf16.msra.mxu0 0
        %405 = vmatprep.subr.bf16.mxu0 0
        %406 = vmatpush1.bf16.msra.mxu0 0
        %407 = vmatprep.subr.bf16.mxu0 0
        %408 = vmatpush1.bf16.msra.mxu0 %v388
        %409 = vmatprep.subr.bf16.mxu0 0
        %410 = vmatpush1.bf16.msra.mxu0 %v387
        %411 = vmatprep.subr.bf16.mxu0 0
        %412 = vmatpush2.bf16.msra.mxu0 0
        %413 = vmatprep.subr.bf16.mxu0 0
        %414 = vmatpush2.bf16.msra.mxu0 0
        %415 = vmatprep.subr.bf16.mxu0 0
        %416 = vmatpush2.bf16.msra.mxu0 0
        %417 = vmatprep.subr.bf16.mxu0 0
        %418 = vmatpush2.bf16.msra.mxu0 0
        %419 = vmatprep.subr.bf16.mxu0 0
        %420 = vmatpush2.bf16.msra.mxu0 0
        %421 = vmatprep.subr.bf16.mxu0 0
        %422 = vmatpush2.bf16.msra.mxu0 0
        %423 = vmatprep.subr.bf16.mxu0 0
        %424 = vmatpush2.bf16.msra.mxu0 0
        %425 = vmatprep.subr.bf16.mxu0 0
        %426 = vmatpush2.bf16.msra.mxu0 0
        %427 = vmatprep.mubr.bf16.mxu0 0
        %428 = vmatmul.mubr.bf16.gmra.mxu0 %v393
        %v429 = vpop.f32.mrf.mxu0
        %v430 = vadd.f32 %v377, %v429
        %v431 = vpop.f32.mrf.mxu0
        %v432 = vpop.f32.mrf.mxu0
        %v433 = vpop.f32.mrf.mxu0
        %434 = vdwg.mxu0
        %v435 = vmax.f32 %v430, 0.0
        %v436 = vpack.c.bf16 %v435, %v435
        %v437 = vld [vmem:[%s5] sm:$0xf]
        %v438 = vld [vmem:[%s5 + $0x4] sm:$0xf]
        %v439 = vld [vmem:[%s5 + $0x8] sm:$0xf]
        %v440 = vld [vmem:[%s5 + $0xc] sm:$0xf]
        %v441 = vld [vmem:[%s6] sm:$0x1]
        %v443 = vlaneseq
        %v444 = vshrl.u32 %v443, 7
        %v445 = vsub.s32 0, %v444
        %v446 = vrot.slane %v441, %v445
        %v452 = vunpack.c.l.b16 %v437
        %v453 = vunpack.c.l.b16 %v438
        %v454 = vunpack.c.l.b16 %v439
        %v455 = vunpack.c.l.b16 %v440
        %v456 = vpack.c.b16 %v453, %v452
        %v457 = vpack.c.b16 %v455, %v454
        %v461 = vsel %vm391, %v436, 0
        %463 = vmatprep.subr.bf16.mxu0 0
        %464 = vmatpush1.bf16.msra.mxu0 0
        %465 = vmatprep.subr.bf16.mxu0 0
        %466 = vmatpush1.bf16.msra.mxu0 0
        %467 = vmatprep.subr.bf16.mxu0 0
        %468 = vmatpush1.bf16.msra.mxu0 0
        %469 = vmatprep.subr.bf16.mxu0 0
        %470 = vmatpush1.bf16.msra.mxu0 0
        %471 = vmatprep.subr.bf16.mxu0 0
        %472 = vmatpush1.bf16.msra.mxu0 0
        %473 = vmatprep.subr.bf16.mxu0 0
        %474 = vmatpush1.bf16.msra.mxu0 0
        %475 = vmatprep.subr.bf16.mxu0 0
        %476 = vmatpush1.bf16.msra.mxu0 %v457
        %477 = vmatprep.subr.bf16.mxu0 0
        %478 = vmatpush1.bf16.msra.mxu0 %v456
        %479 = vmatprep.subr.bf16.mxu0 0
        %480 = vmatpush2.bf16.msra.mxu0 0
        %481 = vmatprep.subr.bf16.mxu0 0
        %482 = vmatpush2.bf16.msra.mxu0 0
        %483 = vmatprep.subr.bf16.mxu0 0
        %484 = vmatpush2.bf16.msra.mxu0 0
        %485 = vmatprep.subr.bf16.mxu0 0
        %486 = vmatpush2.bf16.msra.mxu0 0
        %487 = vmatprep.subr.bf16.mxu0 0
        %488 = vmatpush2.bf16.msra.mxu0 0
        %489 = vmatprep.subr.bf16.mxu0 0
        %490 = vmatpush2.bf16.msra.mxu0 0
        %491 = vmatprep.subr.bf16.mxu0 0
        %492 = vmatpush2.bf16.msra.mxu0 0
        %493 = vmatprep.subr.bf16.mxu0 0
        %494 = vmatpush2.bf16.msra.mxu0 0
        %495 = vmatprep.mubr.bf16.mxu0 0
        %496 = vmatmul.mubr.bf16.gmra.mxu0 %v461
        %v497 = vpop.f32.mrf.mxu0
        %v498 = vadd.f32 %v446, %v497
        %v499 = vpop.f32.mrf.mxu0
        %v500 = vpop.f32.mrf.mxu0
        %v501 = vpop.f32.mrf.mxu0
        %502 = vdwg.mxu0
        %vm503 = vcmask 64512
        %v504 = vsel %vm503, %v498, -inf
        %505 = vmax.xlane.f32.xlu0 %v504
        %v506 = vpop.xlane.xlu0 %505
        %v507 = vsub.f32 %v498, %v506
        %v508 = vmul.f32 %v507, 1.442695
        %v509 = vpow.pop %v508
        %v510 = vsel %vm503, %v509, 0.0
        %511 = vadd.xlane.f32.xlu0 %v510
        %v512 = vpop.xlane.xlu0 %511
        %v513 = vrcp.pop %v512
        %v514 = vmul.f32 %v509, %v513
        %515 = vst.msk [vmem:[%s303] sm:$0xff] %vm503, %v514
        %p516 = scmp.lt.s32.totalorder %s20, 1
        %s517 = scalar_select %p516, %s20, 1
        %s518 = smul.addr %s517, 8
        %s519 = scalar_lea.vmem %s7, %s518
        // Predicated region
        $region57: #{tpu_custom_call.1} parent=47 // pred_check
          %p520 = pneg %p190
        $region58: #{tpu_custom_call.1} parent=47 // pred_check_branch
          %522 = sbr.rel (%p520) target = $region60
        $region59: #{tpu_custom_call.1} parent=47 // pred_region
          _
        $region60: #{tpu_custom_call.1} parent=47 // pred_fallthru
          _
      $region48: #{tpu_custom_call.1} parent=5 // pred_fallthru
        _
      %p523 = scmp.le.s32.totalorder 2, %s15
      // Predicated region
      $region61: #{tpu_custom_call.1} parent=5 // pred_check
        %p524 = pneg %p523
      $region62: #{tpu_custom_call.1} parent=5 // pred_check_branch
        %526 = sbr.rel (%p524) target = $region64
      $region63: #{tpu_custom_call.1} parent=5 // pred_region
        %s527 = ssub.s32 %s15, 2
        // Predicated region
        $region65: #{tpu_custom_call.1} parent=63 // pred_check
          %p528 = pneg %p196
        $region66: #{tpu_custom_call.1} parent=63 // pred_check_branch
          %530 = sbr.rel (%p528) target = $region68
        $region67: #{tpu_custom_call.1} parent=63 // pred_region
          %p531 = scmp.lt.s32.totalorder %s21, 1
          %s532 = scalar_select %p531, %s21, 1
          %s533 = smul.addr %s532, 8
          %s534 = scalar_lea.vmem %s7, %s533
        $region68: #{tpu_custom_call.1} parent=63 // pred_fallthru
          _
      $region64: #{tpu_custom_call.1} parent=5 // pred_fallthru
        _
    $region6: #{tpu_custom_call.1} parent=1 // loop_footer
      %s19 = sadd.s32 1, %s15
    $region7: #{tpu_custom_call.1} parent=1 // loop_footer_branch
      %14 = sbr.rel target = $region3
    $region8: #{tpu_custom_call.1} parent=1 // loop_exit
      _
    %535 = vsyncpa [#allocation3], 1
    %s536 = scalar_lea.sflag [#allocation3], 1
    %537 = vsyncpa %s536, 1
    %538 = vsyncpa [#allocation5], 1

</llo_original>
